<compile_context>
chip_gen: v7x
topology: tpu7x:2x2x1
jax: 0.10.0
libtpu: 0.0.40
codegen_flags: <defaults>
</compile_context>

<pallas_src>
import jax
import jax.numpy as jnp
from jax.experimental import pallas as pl
from jax.experimental.pallas import tpu as pltpu

_LANES = 128
_DEFAULT_BLOCK_ROWS = 2048          # (2048,128) f32 = 1 MiB per input block
_PALLAS_MIN_ELEMS = 1 << 16         # below this, fused XLA is faster


def _round_up(x, m):
    return ((x + m - 1) // m) * m


def _l2_loss_kernel(pre_ref, gt_ref, mask_ref, sum_ref, cnt_ref):
    # pre_ref/gt_ref/mask_ref: (tr, 128) f32 dense tiles of the flattened data.
    # sum_ref/cnt_ref: (8, 128) f32 output blocks, resident across the
    # 'arbitrary' streaming axis (grid axis 1) -> used as accumulators.
    s = pl.program_id(1)

    @pl.when(s == 0)
    def _():
        sum_ref[...] = jnp.zeros_like(sum_ref)
        cnt_ref[...] = jnp.zeros_like(cnt_ref)

    d = pre_ref[...] - gt_ref[...]
    m = mask_ref[...]
    sq = d * d * m                                            # (tr, 128) VPU
    # sublane-group reduce only (vreg-aligned adds); cross-lane reduce is
    # deferred to the wrapper, once.
    sum_ref[...] += jnp.sum(sq.reshape(-1, 8, _LANES), axis=0)
    cnt_ref[...] += jnp.sum(m.reshape(-1, 8, _LANES), axis=0)


def l2_loss_pallas(pre_xyz, gt_xyz, keypoint_vis, *, block_rows=_DEFAULT_BLOCK_ROWS):
    """Pallas implementation of L2Loss.forward.

    pre_xyz, gt_xyz: (B, K, 3) float
    keypoint_vis:    (B, K, 1) any numeric/bool dtype (nonzero => visible)
    returns: scalar float32 loss
    """
    B, K, C = pre_xyz.shape
    flat_len = B * K * C

    # Free reshapes only (no transposes): flatten element streams.
    pre = pre_xyz.astype(jnp.float32).reshape(flat_len)
    gt = gt_xyz.astype(jnp.float32).reshape(flat_len)
    # Per-element visibility mask (vis broadcast over the C coords), one op.
    mask = jnp.broadcast_to(keypoint_vis != 0, (B, K, C)).astype(jnp.float32)
    mask = mask.reshape(flat_len)

    rows = pl.cdiv(flat_len, _LANES)
    tr = min(block_rows, _round_up(rows, 8))          # adaptive block for tiny inputs
    num_blocks = pl.cdiv(rows, tr)
    P = 2 if num_blocks >= 2 else 1                   # 2 TC partitions on v7x
    S = pl.cdiv(num_blocks, P)
    rows_padded = P * S * tr
    padded_len = rows_padded * _LANES

    def _prep(x):
        x = jnp.pad(x, (0, padded_len - flat_len))    # zero-pad: contributes nothing
        return x.reshape(rows_padded, _LANES)

    pre2, gt2, mask2 = _prep(pre), _prep(gt), _prep(mask)

    def row_map(p, s):
        return (p * S + s, 0)

    out_sum, out_cnt = pl.pallas_call(
        _l2_loss_kernel,
        out_shape=(
            jax.ShapeDtypeStruct((P * 8, _LANES), jnp.float32),
            jax.ShapeDtypeStruct((P * 8, _LANES), jnp.float32),
        ),
        grid_spec=pltpu.PrefetchScalarGridSpec(
            num_scalar_prefetch=0,
            grid=(P, S),
            in_specs=[
                pl.BlockSpec((tr, _LANES), row_map),
                pl.BlockSpec((tr, _LANES), row_map),
                pl.BlockSpec((tr, _LANES), row_map),
            ],
            out_specs=[
                pl.BlockSpec((8, _LANES), lambda p, s: (p, 0)),
                pl.BlockSpec((8, _LANES), lambda p, s: (p, 0)),
            ],
        ),
        compiler_params=pltpu.CompilerParams(
            dimension_semantics=("parallel", "arbitrary")),
    )(pre2, gt2, mask2)

    total_sum = jnp.sum(out_sum)          # sum over visible kp of per-kp sq dist
    cnt_elems = jnp.sum(out_cnt)          # = C * (# visible keypoints), exact
    # masked_select().mean() == total_sum / (cnt_elems / C); 0.0 if nothing visible
    loss = jnp.where(cnt_elems > 0.0,
                     (float(C) * total_sum) / jnp.maximum(cnt_elems, 1.0),
                     0.0)
    return loss


def _reference_l2_loss(pre_xyz, gt_xyz, keypoint_vis):
    # Pure-JAX reference mirroring the PyTorch module.
    sq = jnp.sum((pre_xyz - gt_xyz) ** 2, axis=2)
    mask = keypoint_vis[..., 0] != 0
    cnt = jnp.sum(mask)
    return jnp.where(cnt > 0,
                     jnp.sum(jnp.where(mask, sq, 0.0)) / jnp.maximum(cnt, 1),
                     0.0)


def l2_loss(pre_xyz, gt_xyz, keypoint_vis):
    """Dispatcher: tiny problems use the fused pure-JAX path (per-call Pallas
    overhead dominates there); large problems stream through the kernel."""
    B, K, C = pre_xyz.shape
    if B * K * C < _PALLAS_MIN_ELEMS:
        return _reference_l2_loss(pre_xyz.astype(jnp.float32),
                                  gt_xyz.astype(jnp.float32),
                                  keypoint_vis)
    return l2_loss_pallas(pre_xyz, gt_xyz, keypoint_vis)


if __name__ == "__main__":
    key = jax.random.PRNGKey(0)
    k1, k2, k3 = jax.random.split(key, 3)

    # Small shape consistent with the module: batch=2, 16 keypoints, xyz.
    B, K, C = 2, 16, 3
    pre_xyz = jax.random.normal(k1, (B, K, C), dtype=jnp.float32)
    gt_xyz = jax.random.normal(k2, (B, K, C), dtype=jnp.float32)
    keypoint_vis = (jax.random.uniform(k3, (B, K, 1)) > 0.3).astype(jnp.float32)

    # Run the Pallas kernel explicitly (dispatcher would route this toy size
    # to pure JAX).
    loss = jax.block_until_ready(l2_loss_pallas(pre_xyz, gt_xyz, keypoint_vis))
    ref = _reference_l2_loss(pre_xyz, gt_xyz, keypoint_vis)
    assert jnp.allclose(loss, ref, rtol=1e-5, atol=1e-6), (loss, ref)

    # All-invisible edge case (module returns 0.0).
    zero_vis = jnp.zeros((B, K, 1), dtype=jnp.float32)
    loss0 = jax.block_until_ready(l2_loss_pallas(pre_xyz, gt_xyz, zero_vis))
    assert jnp.allclose(loss0, 0.0), loss0

    # Larger case exercising multi-block streaming, padding and the parallel axis.
    B2, K2 = 2, 40000
    p2 = jax.random.normal(k1, (B2, K2, C), dtype=jnp.float32)
    g2 = jax.random.normal(k2, (B2, K2, C), dtype=jnp.float32)
    v2 = (jax.random.uniform(k3, (B2, K2, 1)) > 0.5).astype(jnp.float32)
    loss2 = jax.block_until_ready(l2_loss_pallas(p2, g2, v2))
    ref2 = _reference_l2_loss(p2, g2, v2)
    assert jnp.allclose(loss2, ref2, rtol=1e-4, atol=1e-5), (loss2, ref2)

    # Dispatcher smoke test (small shape -> pure-JAX path).
    loss_d = jax.block_until_ready(l2_loss(pre_xyz, gt_xyz, keypoint_vis))
    assert jnp.allclose(loss_d, ref, rtol=1e-5, atol=1e-6), (loss_d, ref)

    print("KERNEL_OK")
</pallas_src>

<mosaic_0001>
module attributes {stable_mosaic.version = 11 : i64} {
  func.func @_l2_loss_kernel(%arg0: i32, %arg1: i32, %arg2: memref<8x128xf32, #tpu.memory_space<vmem>>, %arg3: memref<8x128xf32, #tpu.memory_space<vmem>>, %arg4: memref<8x128xf32, #tpu.memory_space<vmem>>, %arg5: memref<8x128xf32, #tpu.memory_space<vmem>>, %arg6: memref<8x128xf32, #tpu.memory_space<vmem>>) attributes {dimension_semantics = [#tpu.dimension_semantics<parallel>, #tpu.dimension_semantics<arbitrary>], iteration_bounds = array<i64: 1, 1>, scalar_prefetch = 0 : i64, scratch_operands = 0 : i64, tpu.core_type = #tpu.core_type<tc>, window_params = [{transform_indices = @transform_0, window_bounds = array<i64: 8, 128>}, {transform_indices = @transform_1, window_bounds = array<i64: 8, 128>}, {transform_indices = @transform_2, window_bounds = array<i64: 8, 128>}, {transform_indices = @transform_3, window_bounds = array<i64: 8, 128>}, {transform_indices = @transform_4, window_bounds = array<i64: 8, 128>}]} {
    %c0_i32 = arith.constant 0 : i32
    %0 = arith.cmpi eq, %arg1, %c0_i32 : i32
    %1 = arith.extui %0 : i1 to i32
    %c0_i32_0 = arith.constant 0 : i32
    %2 = arith.cmpi ne, %1, %c0_i32_0 : i32
    scf.if %2 {
      %cst_15 = arith.constant 0.000000e+00 : f32
      %19 = vector.broadcast %cst_15 : f32 to vector<8x128xf32>
      %c0_16 = arith.constant 0 : index
      %c0_17 = arith.constant 0 : index
      %20 = vector.load %arg5[%c0_16, %c0_17] : memref<8x128xf32, #tpu.memory_space<vmem>>, vector<8x128xf32>
      tpu.vector_store %arg5[%c0_16, %c0_17], %19 {strides = array<i32>} : memref<8x128xf32, #tpu.memory_space<vmem>>, vector<8x128xf32>,
      %cst_18 = arith.constant 0.000000e+00 : f32
      %21 = vector.broadcast %cst_18 : f32 to vector<8x128xf32>
      %c0_19 = arith.constant 0 : index
      %c0_20 = arith.constant 0 : index
      %22 = vector.load %arg6[%c0_19, %c0_20] : memref<8x128xf32, #tpu.memory_space<vmem>>, vector<8x128xf32>
      tpu.vector_store %arg6[%c0_19, %c0_20], %21 {strides = array<i32>} : memref<8x128xf32, #tpu.memory_space<vmem>>, vector<8x128xf32>,
    } else {
    }
    %c0 = arith.constant 0 : index
    %c0_1 = arith.constant 0 : index
    %3 = vector.load %arg2[%c0, %c0_1] : memref<8x128xf32, #tpu.memory_space<vmem>>, vector<8x128xf32>
    %c0_2 = arith.constant 0 : index
    %c0_3 = arith.constant 0 : index
    %4 = vector.load %arg3[%c0_2, %c0_3] : memref<8x128xf32, #tpu.memory_space<vmem>>, vector<8x128xf32>
    %5 = arith.subf %3, %4 : vector<8x128xf32>
    %c0_4 = arith.constant 0 : index
    %c0_5 = arith.constant 0 : index
    %6 = vector.load %arg4[%c0_4, %c0_5] : memref<8x128xf32, #tpu.memory_space<vmem>>, vector<8x128xf32>
    %7 = arith.mulf %5, %5 : vector<8x128xf32>
    %8 = arith.mulf %7, %6 : vector<8x128xf32>
    %c0_6 = arith.constant 0 : index
    %c0_7 = arith.constant 0 : index
    %9 = vector.load %arg5[%c0_6, %c0_7] : memref<8x128xf32, #tpu.memory_space<vmem>>, vector<8x128xf32>
    %10 = vector.shape_cast %8 : vector<8x128xf32> to vector<1x8x128xf32>
    %cst = arith.constant dense<0.000000e+00> : vector<8x128xf32>
    %11 = vector.multi_reduction <add>, %10, %cst [0] : vector<1x8x128xf32> to vector<8x128xf32>
    %12 = arith.addf %9, %11 : vector<8x128xf32>
    %c0_8 = arith.constant 0 : index
    %c0_9 = arith.constant 0 : index
    %13 = vector.load %arg5[%c0_8, %c0_9] : memref<8x128xf32, #tpu.memory_space<vmem>>, vector<8x128xf32>
    tpu.vector_store %arg5[%c0_8, %c0_9], %12 {strides = array<i32>} : memref<8x128xf32, #tpu.memory_space<vmem>>, vector<8x128xf32>,
    %c0_10 = arith.constant 0 : index
    %c0_11 = arith.constant 0 : index
    %14 = vector.load %arg6[%c0_10, %c0_11] : memref<8x128xf32, #tpu.memory_space<vmem>>, vector<8x128xf32>
    %15 = vector.shape_cast %6 : vector<8x128xf32> to vector<1x8x128xf32>
    %cst_12 = arith.constant dense<0.000000e+00> : vector<8x128xf32>
    %16 = vector.multi_reduction <add>, %15, %cst_12 [0] : vector<1x8x128xf32> to vector<8x128xf32>
    %17 = arith.addf %14, %16 : vector<8x128xf32>
    %c0_13 = arith.constant 0 : index
    %c0_14 = arith.constant 0 : index
    %18 = vector.load %arg6[%c0_13, %c0_14] : memref<8x128xf32, #tpu.memory_space<vmem>>, vector<8x128xf32>
    tpu.vector_store %arg6[%c0_13, %c0_14], %17 {strides = array<i32>} : memref<8x128xf32, #tpu.memory_space<vmem>>, vector<8x128xf32>,
    return
  }
  func.func @transform_0(%arg0: i32, %arg1: i32) -> (i32, i32) {
    %c1_i32 = arith.constant 1 : i32
    %0 = arith.muli %arg0, %c1_i32 : i32
    %1 = arith.addi %0, %arg1 : i32
    %c0_i32 = arith.constant 0 : i32
    %c0_i32_0 = arith.constant 0 : i32
    return %1, %c0_i32 : i32, i32
  }
  func.func @transform_1(%arg0: i32, %arg1: i32) -> (i32, i32) {
    %c1_i32 = arith.constant 1 : i32
    %0 = arith.muli %arg0, %c1_i32 : i32
    %1 = arith.addi %0, %arg1 : i32
    %c0_i32 = arith.constant 0 : i32
    %c0_i32_0 = arith.constant 0 : i32
    return %1, %c0_i32 : i32, i32
  }
  func.func @transform_2(%arg0: i32, %arg1: i32) -> (i32, i32) {
    %c1_i32 = arith.constant 1 : i32
    %0 = arith.muli %arg0, %c1_i32 : i32
    %1 = arith.addi %0, %arg1 : i32
    %c0_i32 = arith.constant 0 : i32
    %c0_i32_0 = arith.constant 0 : i32
    return %1, %c0_i32 : i32, i32
  }
  func.func @transform_3(%arg0: i32, %arg1: i32) -> (i32, i32) {
    %c0_i32 = arith.constant 0 : i32
    %c0_i32_0 = arith.constant 0 : i32
    return %arg0, %c0_i32 : i32, i32
  }
  func.func @transform_4(%arg0: i32, %arg1: i32) -> (i32, i32) {
    %c0_i32 = arith.constant 0 : i32
    %c0_i32_0 = arith.constant 0 : i32
    return %arg0, %c0_i32 : i32, i32
  }
}

</mosaic_0001>

<llo_original>
// kernel: tpu_custom_call.1
$region0: #{tpu_custom_call.1}
  #allocation0 [shape = 'u32[]', space=smem, size = 0x4, offset = 0x4, fixed_abs, tag = 'smem constant byte address 0x4 - core index']
  #allocation1 [shape = 'u32[144,128]{1,0:T(1,128)}', space=vmem, size = 0x12000, scoped, tag = 'internal scratch']
  %s0 = inlined_call_operand.hbm [shape: f32[8,128], index: 0, kind: input, shape index: {}]
  %s1 = inlined_call_operand.hbm [shape: f32[8,128], index: 1, kind: input, shape index: {}]
  %s2 = inlined_call_operand.hbm [shape: f32[8,128], index: 2, kind: input, shape index: {}]
  %s3 = inlined_call_operand.hbm [shape: f32[8,128], index: 3, kind: output, shape index: {0}]
  %s4 = inlined_call_operand.hbm [shape: f32[8,128], index: 4, kind: output, shape index: {1}]
  %5 = xla_tuple %s3, %s4
  %s6 = sld [smem:[#allocation0]]
  $region46: #{tpu_custom_call.1} parent=0
    _
  %s8 = ssub.s32 1, %s6
  %s9 = scalar_select 0, %s8, %s6
  $region1: #{tpu_custom_call.1} parent=0
    #allocation2 [shape = 'u8[4096]{0}', space=vmem, size = 0x1000, scoped, tag = 'input window, operand 0, single buffered']
    #allocation3 [shape = 's32[1]{0}', space=sflag, size = 0x4, scoped, tag = 'scoped memory for tpu_custom_call.1']
    #allocation4 [shape = 's32[1]{0}', space=sflag, size = 0x4, scoped, tag = 'scoped memory for tpu_custom_call.1']
    #allocation5 [shape = 'u8[4096]{0}', space=vmem, size = 0x1000, scoped, tag = 'input window, operand 1, single buffered']
    #allocation6 [shape = 's32[1]{0}', space=sflag, size = 0x4, scoped, tag = 'scoped memory for tpu_custom_call.1']
    #allocation7 [shape = 'u8[4096]{0}', space=vmem, size = 0x1000, scoped, tag = 'input window, operand 2, single buffered']
    #allocation8 [shape = 'u8[4096]{0}', space=vmem, size = 0x1000, scoped, tag = 'output window, operand 0, single buffered']
    #allocation9 [shape = 'u8[4096]{0}', space=vmem, size = 0x1000, scoped, tag = 'output window, operand 1, single buffered']
    #allocation10 [shape = 's32[1]{0}', space=sflag, size = 0x4, scoped, tag = 'scoped memory for tpu_custom_call.1']
    %10 = vsyncpa [#allocation3], 0
    %11 = vsyncpa [#allocation6], 0
    %12 = vsyncpa [#allocation4], 0
    %13 = vsyncpa [#allocation10], 0
    // Predicated region
    $region2: #{tpu_custom_call.1} parent=1 // pred_check
      _
    $region3: #{tpu_custom_call.1} parent=1 // pred_check_branch
      %15 = sbr.rel (0) target = $region5
    $region4: #{tpu_custom_call.1} parent=1 // pred_region
      %s16 = sadd.s32 0, 0
      %s18 = ssub.s32 128, 128
      %19 = vsyncadd [#allocation3], %s18
      %s20 = smul.addr %s16, 128
      %s21 = scalar_lea.hbm %s0, %s20
      %s23 = sshll.u32 [#allocation2], 4
      %s24 = int_to_ptr.vmem [resolvable:$true] %s23
      %26 = dma.hbm_to_vmem [thread:$0]  %s21, 128, %s24, [#allocation3]
    $region5: #{tpu_custom_call.1} parent=1 // pred_fallthru
      _
    // Predicated region
    $region6: #{tpu_custom_call.1} parent=1 // pred_check
      _
    $region7: #{tpu_custom_call.1} parent=1 // pred_check_branch
      %28 = sbr.rel (0) target = $region9
    $region8: #{tpu_custom_call.1} parent=1 // pred_region
      %s29 = sadd.s32 0, 0
      %s31 = ssub.s32 128, 128
      %32 = vsyncadd [#allocation6], %s31
      %s33 = smul.addr %s29, 128
      %s34 = scalar_lea.hbm %s1, %s33
      %s36 = sshll.u32 [#allocation5], 4
      %s37 = int_to_ptr.vmem [resolvable:$true] %s36
      %39 = dma.hbm_to_vmem [thread:$0]  %s34, 128, %s37, [#allocation6]
    $region9: #{tpu_custom_call.1} parent=1 // pred_fallthru
      _
    // Predicated region
    $region10: #{tpu_custom_call.1} parent=1 // pred_check
      _
    $region11: #{tpu_custom_call.1} parent=1 // pred_check_branch
      %41 = sbr.rel (0) target = $region13
    $region12: #{tpu_custom_call.1} parent=1 // pred_region
      %s42 = sadd.s32 0, 0
      %s44 = ssub.s32 128, 128
      %45 = vsyncadd [#allocation6], %s44
      %s46 = smul.addr %s42, 128
      %s47 = scalar_lea.hbm %s2, %s46
      %s49 = sshll.u32 [#allocation7], 4
      %s50 = int_to_ptr.vmem [resolvable:$true] %s49
      %52 = dma.hbm_to_vmem [thread:$0]  %s47, 128, %s50, [#allocation6]
    $region13: #{tpu_custom_call.1} parent=1 // pred_fallthru
      _
    // Predicated region
    $region14: #{tpu_custom_call.1} parent=1 // pred_check
      _
    $region15: #{tpu_custom_call.1} parent=1 // pred_check_branch
      %54 = sbr.rel (0) target = $region17
    $region16: #{tpu_custom_call.1} parent=1 // pred_region
      %55 = dma.done [#allocation3], 128
    $region17: #{tpu_custom_call.1} parent=1 // pred_fallthru
      _
    // Predicated region
    $region18: #{tpu_custom_call.1} parent=1 // pred_check
      _
    $region19: #{tpu_custom_call.1} parent=1 // pred_check_branch
      %57 = sbr.rel (0) target = $region21
    $region20: #{tpu_custom_call.1} parent=1 // pred_region
      %58 = dma.done [#allocation6], 128
    $region21: #{tpu_custom_call.1} parent=1 // pred_fallthru
      _
    // Predicated region
    $region22: #{tpu_custom_call.1} parent=1 // pred_check
      _
    $region23: #{tpu_custom_call.1} parent=1 // pred_check_branch
      %60 = sbr.rel (0) target = $region25
    $region24: #{tpu_custom_call.1} parent=1 // pred_region
      %61 = dma.done [#allocation6], 128
    $region25: #{tpu_custom_call.1} parent=1 // pred_fallthru
      _
    %s62 = sadd.s32 0, 0
    %s63 = sadd.s32 0, 0
    %s64 = sadd.s32 0, 0
    %p65 = scmp.eq.s32.totalorder 0, 0
    // Predicated region
    $region26: #{tpu_custom_call.1} parent=1 // pred_check
      %p66 = pneg %p65
    $region27: #{tpu_custom_call.1} parent=1 // pred_check_branch
      %68 = sbr.rel (%p66) target = $region29
    $region28: #{tpu_custom_call.1} parent=1 // pred_region
      %69 = vst [vmem:[#allocation8] sm:$0xff] 0.0
      %70 = vst [vmem:[#allocation9] sm:$0xff] 0.0
    $region29: #{tpu_custom_call.1} parent=1 // pred_fallthru
      _
    %v71 = vld [vmem:[#allocation2] sm:$0xff]
    %v72 = vld [vmem:[#allocation5] sm:$0xff]
    %v73 = vsub.f32 %v71, %v72
    %v74 = vld [vmem:[#allocation7] sm:$0xff]
    %v75 = vmul.f32 %v73, %v73
    %v76 = vmul.f32 %v75, %v74
    %v77 = vld [vmem:[#allocation8] sm:$0xff]
    %v78 = vadd.f32 %v76, 0.0
    %v79 = vadd.f32 %v77, %v78
    %80 = vst [vmem:[#allocation8] sm:$0xff] %v79
    %v81 = vld [vmem:[#allocation9] sm:$0xff]
    %v82 = vadd.f32 %v74, 0.0
    %v83 = vadd.f32 %v81, %v82
    %84 = vst [vmem:[#allocation9] sm:$0xff] %v83
    // Predicated region
    $region30: #{tpu_custom_call.1} parent=1 // pred_check
      _
    $region31: #{tpu_custom_call.1} parent=1 // pred_check_branch
      %86 = sbr.rel (0) target = $region33
    $region32: #{tpu_custom_call.1} parent=1 // pred_region
      %s88 = ssub.s32 128, 128
      %89 = vsyncadd [#allocation4], %s88
      %s91 = sshll.u32 [#allocation8], 4
      %s92 = int_to_ptr.vmem [resolvable:$true] %s91
      %94 = dma.vmem_to_hbm [thread:$0]  %s92, 128, %s3, [#allocation4]
    $region33: #{tpu_custom_call.1} parent=1 // pred_fallthru
      _
    // Predicated region
    $region34: #{tpu_custom_call.1} parent=1 // pred_check
      _
    $region35: #{tpu_custom_call.1} parent=1 // pred_check_branch
      %96 = sbr.rel (0) target = $region37
    $region36: #{tpu_custom_call.1} parent=1 // pred_region
      %s98 = ssub.s32 128, 128
      %99 = vsyncadd [#allocation10], %s98
      %s101 = sshll.u32 [#allocation9], 4
      %s102 = int_to_ptr.vmem [resolvable:$true] %s101
      %104 = dma.vmem_to_hbm [thread:$0]  %s102, 128, %s4, [#allocation10]
    $region37: #{tpu_custom_call.1} parent=1 // pred_fallthru
      _
    // Predicated region
    $region38: #{tpu_custom_call.1} parent=1 // pred_check
      _
    $region39: #{tpu_custom_call.1} parent=1 // pred_check_branch
      %106 = sbr.rel (0) target = $region41
    $region40: #{tpu_custom_call.1} parent=1 // pred_region
      %107 = dma.done [#allocation4], 128
    $region41: #{tpu_custom_call.1} parent=1 // pred_fallthru
      _
    // Predicated region
    $region42: #{tpu_custom_call.1} parent=1 // pred_check
      _
    $region43: #{tpu_custom_call.1} parent=1 // pred_check_branch
      %109 = sbr.rel (0) target = $region45
    $region44: #{tpu_custom_call.1} parent=1 // pred_region
      %110 = dma.done [#allocation10], 128
    $region45: #{tpu_custom_call.1} parent=1 // pred_fallthru
      _
    %111 = vsyncpa [#allocation3], 1
    %112 = vsyncpa [#allocation6], 1
    %113 = vsyncpa [#allocation4], 1
    %114 = vsyncpa [#allocation10], 1

</llo_original>
